<compile_context>
chip_gen: v6e
topology: v6e:2x2x1
jax: 0.10.0
libtpu: 0.0.40
codegen_flags: <defaults>
</compile_context>

<pallas_src>
import functools
import math

import numpy as np
import jax
import jax.numpy as jnp
from jax import lax
from jax.experimental import pallas as pl
from jax.experimental.pallas import tpu as pltpu


def _pick_tile(dim: int, pref: int, quantum: int) -> int:
    """Largest tile <= pref that divides `dim` and is a multiple of `quantum`;
    falls back to the full dim (full-extent blocks are always legal)."""
    if dim <= pref:
        return dim
    t = (pref // quantum) * quantum
    while t >= quantum:
        if dim % t == 0:
            return t
        t -= quantum
    return dim


# ----------------------------------------------------------------------------
# Kernel 1: fused QKV projection  (x @ W_attn + b_attn)  — the c_attn Linear
# ----------------------------------------------------------------------------
def _qkv_proj_kernel(x_ref, w_ref, b_ref, o_ref, acc_ref):
    @pl.when(pl.program_id(2) == 0)
    def _():
        acc_ref[...] = jnp.zeros_like(acc_ref)

    # Operands arrive already in the compute dtype (bf16 on the fast path);
    # accumulate in f32 on the MXU.
    acc_ref[...] += jnp.dot(x_ref[...], w_ref[...],
                            preferred_element_type=jnp.float32)

    # Bias add (f32) + downcast only in the k==last epilogue.
    @pl.when(pl.program_id(2) == pl.num_programs(2) - 1)
    def _():
        o_ref[...] = (acc_ref[...] + b_ref[...]).astype(o_ref.dtype)


def qkv_proj(x2d, w, b, *, out_dtype, tm=256, tn=256, tk=512):
    """x2d: (M, C), w: (C, 3C) [compute dtype], b: (1, 3C) f32 -> (M, 3C)."""
    M, K = x2d.shape
    N = w.shape[1]
    tm = _pick_tile(M, tm, 128)   # 128-quantum: full MXU rows, clean tiling
    tn = _pick_tile(N, tn, 128)
    tk = _pick_tile(K, tk, 128)
    grid = (M // tm, N // tn, K // tk)

    return pl.pallas_call(
        _qkv_proj_kernel,
        out_shape=jax.ShapeDtypeStruct((M, N), out_dtype),
        grid_spec=pltpu.PrefetchScalarGridSpec(
            num_scalar_prefetch=0,
            grid=grid,
            in_specs=[
                pl.BlockSpec((tm, tk), lambda i, j, k: (i, k)),
                pl.BlockSpec((tk, tn), lambda i, j, k: (k, j)),
                pl.BlockSpec((1, tn), lambda i, j, k: (0, j)),
            ],
            out_specs=pl.BlockSpec((tm, tn), lambda i, j, k: (i, j)),
            scratch_shapes=[pltpu.VMEM((tm, tn), jnp.float32)],
        ),
        compiler_params=pltpu.CompilerParams(
            dimension_semantics=("parallel", "parallel", "arbitrary"),
            vmem_limit_bytes=32 * 1024 * 1024,  # safe on all gens incl. v7x (64 MiB phys)
        ),
    )(x2d, w, b)


# ----------------------------------------------------------------------------
# Kernel 2: flash-style causal attention over a triangular (qi, ki<=qi) grid
# ----------------------------------------------------------------------------
def _flash_attn_kernel(qi_tbl, ki_tbl, q_ref, k_ref, v_ref, o_ref,
                       m_sc, l_sc, acc_sc, *,
                       n_head, head_dim, block_q, block_kv, approx_recip):
    t = pl.program_id(1)
    qi = qi_tbl[t]          # query-block index for this flattened step
    ki = ki_tbl[t]          # kv-block index   (always <= qi: triangular grid)
    C = n_head * head_dim

    @pl.when(ki == 0)
    def _():
        m_sc[...] = jnp.full_like(m_sc, -1e30)
        l_sc[...] = jnp.zeros_like(l_sc)
        acc_sc[...] = jnp.zeros_like(acc_sc)

    # q/k/v are already in the compute dtype (bf16 fast path); scale is
    # pre-folded into the Q projection weights, so no per-step scaling/cast.
    q3 = q_ref[...].reshape(block_q, n_head, head_dim)
    k3 = k_ref[...].reshape(block_kv, n_head, head_dim)
    v3 = v_ref[...].reshape(block_kv, n_head, head_dim)

    # Batched over heads on the MXU, f32 accumulate: (n_head, bq, bkv)
    s = jnp.einsum("qhd,khd->hqk", q3, k3, preferred_element_type=jnp.float32)

    # Causal mask (mask in f32, never cast -1e30 to bf16).
    rows = qi * block_q + lax.broadcasted_iota(jnp.int32, (block_q, block_kv), 0)
    cols = ki * block_kv + lax.broadcasted_iota(jnp.int32, (block_q, block_kv), 1)
    s = jnp.where((cols <= rows)[None, :, :], s, -1e30)

    # Online softmax update — lane-dense (n_head, block_q) state, full-tensor ops.
    m_prev = m_sc[...]                                  # (H, bq)
    m_new = jnp.maximum(m_prev, jnp.max(s, axis=-1))    # (H, bq)
    alpha = jnp.exp(m_prev - m_new)                     # (H, bq)
    p = jnp.exp(s - m_new[:, :, None])                  # (H, bq, bkv), f32
    l_sc[...] = alpha * l_sc[...] + jnp.sum(p, axis=-1)
    m_sc[...] = m_new

    # P·V batched over heads; single full-width (bq, C) accumulator update.
    pv = jnp.einsum("hqk,khd->qhd", p.astype(v3.dtype), v3,
                    preferred_element_type=jnp.float32)     # (bq, H, hd)
    acc3 = acc_sc[...].reshape(block_q, n_head, head_dim)
    acc3 = acc3 * alpha.T[:, :, None] + pv
    acc_sc[...] = acc3.reshape(block_q, C)

    # Epilogue on the diagonal step (last kv step for this query block):
    # one full-width normalize + one lane-dense (bq, C) store.
    @pl.when(ki == qi)
    def _():
        if approx_recip:
            inv_l = pl.reciprocal(l_sc[...], approx=True)    # EUP slot, ~free
        else:
            inv_l = 1.0 / l_sc[...]                          # exact (f32 path)
        out3 = acc_sc[...].reshape(block_q, n_head, head_dim) * inv_l.T[:, :, None]
        o_ref[...] = out3.reshape(block_q, C).astype(o_ref.dtype)


def fused_causal_attention(qkv, n_head, *, block_q=256, approx_recip=True):
    """qkv: (B, T, 3C) fused projection -> (B, T, C) causal attention output.

    block_q=256 is the v6e/v7x-friendly default; 128 is fine on v5e or for
    short sequences.  If profiling shows exposed K/V DMA, add
    pipeline_mode=pl.Buffered(3) to k_spec / v_spec.
    """
    B, T, C3 = qkv.shape
    C = C3 // 3
    head_dim = C // n_head

    bq = _pick_tile(T, block_q, 8)
    bkv = bq   # causal block skipping assumes equal q/kv block sizes
    nq = T // bq

    # Flattened triangular kv axis: only the (qi, ki<=qi) steps exist, so the
    # ~50% fully-masked grid steps (and their ~0.35us overhead each) vanish.
    qi_list, ki_list = [], []
    for qidx in range(nq):
        for kidx in range(qidx + 1):
            qi_list.append(qidx)
            ki_list.append(kidx)
    qi_tbl = jnp.asarray(np.asarray(qi_list, dtype=np.int32))
    ki_tbl = jnp.asarray(np.asarray(ki_list, dtype=np.int32))
    n_tri = len(qi_list)

    if C % 128 == 0:
        # Read q/k/v straight out of the fused array via column-block offsets
        # 0 / 1 / 2 (block width C) — no split / transpose HBM round trips.
        args = (qkv, qkv, qkv)
        cq, ck, cv = 0, 1, 2
    else:
        # Fallback for C not a lane multiple: materialize the split once.
        args = tuple(jnp.split(qkv, 3, axis=-1))
        cq, ck, cv = 0, 0, 0

    q_spec = pl.BlockSpec((pl.Squeezed(), bq, C),
                          lambda b, t, qt, kt: (b, qt[t], cq))
    k_spec = pl.BlockSpec((pl.Squeezed(), bkv, C),
                          lambda b, t, qt, kt: (b, kt[t], ck))
    v_spec = pl.BlockSpec((pl.Squeezed(), bkv, C),
                          lambda b, t, qt, kt: (b, kt[t], cv))
    o_spec = pl.BlockSpec((pl.Squeezed(), bq, C),
                          lambda b, t, qt, kt: (b, qt[t], 0))

    kernel = functools.partial(
        _flash_attn_kernel, n_head=n_head, head_dim=head_dim,
        block_q=bq, block_kv=bkv, approx_recip=approx_recip)

    return pl.pallas_call(
        kernel,
        out_shape=jax.ShapeDtypeStruct((B, T, C), qkv.dtype),
        grid_spec=pltpu.PrefetchScalarGridSpec(
            num_scalar_prefetch=2,
            grid=(B, n_tri),
            in_specs=[q_spec, k_spec, v_spec],
            out_specs=o_spec,
            scratch_shapes=[
                pltpu.VMEM((n_head, bq), jnp.float32),   # running max m (lane-dense)
                pltpu.VMEM((n_head, bq), jnp.float32),   # running sum l (lane-dense)
                pltpu.VMEM((bq, C), jnp.float32),        # output accumulator
            ],
        ),
        compiler_params=pltpu.CompilerParams(
            dimension_semantics=("parallel", "arbitrary"),
            vmem_limit_bytes=32 * 1024 * 1024,
        ),
    )(qi_tbl, ki_tbl, *args)


# ----------------------------------------------------------------------------
# Module wrapper
# ----------------------------------------------------------------------------
def causal_self_attention_forward(x, params, n_head, dropout=0.0,
                                  compute_dtype=jnp.bfloat16, block_q=256):
    """c_attn -> causal SDPA -> resid_dropout.  (c_proj is NOT applied,
    matching the reference forward().)  Output dtype == compute_dtype."""
    B, T, C = x.shape
    assert C % n_head == 0
    # TODO(synk): training-mode dropout (p > 0) not implemented (inference path).
    assert dropout == 0.0, "resid_dropout with p > 0 is not implemented"
    head_dim = C // n_head

    # One-time wrapper-side prep (tiny vs the matmuls):
    #  * fold the 1/sqrt(head_dim) attention scale into the Q third of the
    #    c_attn weight/bias, removing all per-kv-step q scaling, and
    #  * cast activations/weights to the compute dtype (bf16 fast path) so the
    #    kernels stream half the bytes and do no per-step casting.
    scale = 1.0 / math.sqrt(head_dim)
    col_scale = jnp.concatenate(
        [jnp.full((C,), scale, jnp.float32), jnp.ones((2 * C,), jnp.float32)])
    w = (params["w_attn"] * col_scale[None, :]).astype(compute_dtype)
    b = params["b_attn"] * col_scale[None, :]            # bias stays f32 (epilogue add)
    x2d = x.reshape(B * T, C).astype(compute_dtype)

    qkv = qkv_proj(x2d, w, b, out_dtype=compute_dtype)
    qkv = qkv.reshape(B, T, 3 * C)    # leading-dim reshape only; no data movement

    exact_f32 = jnp.dtype(compute_dtype) == jnp.dtype(jnp.float32)
    y = fused_causal_attention(qkv, n_head, block_q=block_q,
                               approx_recip=not exact_f32)   # (B, T, C)
    # resid_dropout: identity in eval / dropout == 0.0
    return y


def init_params(key, n_embd, bias=True):
    k1, k2, k3, k4 = jax.random.split(key, 4)
    bound = 1.0 / math.sqrt(n_embd)
    # torch Linear weight is (out, in); we store the transpose (in, out).
    w_attn = jax.random.uniform(k1, (n_embd, 3 * n_embd), jnp.float32, -bound, bound)
    b_attn = (jax.random.uniform(k2, (1, 3 * n_embd), jnp.float32, -bound, bound)
              if bias else jnp.zeros((1, 3 * n_embd), jnp.float32))
    # c_proj exists in __init__ but is unused in forward(); kept for parity.
    w_proj = jax.random.uniform(k3, (n_embd, n_embd), jnp.float32, -bound, bound)
    b_proj = jax.random.uniform(k4, (1, n_embd), jnp.float32, -bound, bound)
    return {"w_attn": w_attn, "b_attn": b_attn, "w_proj": w_proj, "b_proj": b_proj}


if __name__ == "__main__":
    # Small config: B=2, T=256, C=128, n_head=4 (head_dim=32), dropout=0, bias=True.
    # block_q=128 with T=256 exercises the triangular flash loop (3 kv steps/batch).
    B, T, C, n_head = 2, 256, 128, 4
    key = jax.random.PRNGKey(0)
    kx, kp = jax.random.split(key)
    x = jax.random.normal(kx, (B, T, C), jnp.float32)
    params = init_params(kp, C, bias=True)

    # Pure-JAX f32 reference (same math, no Pallas).
    qkv_ref = x.reshape(B * T, C) @ params["w_attn"] + params["b_attn"]
    q, k, v = jnp.split(qkv_ref.reshape(B, T, 3 * C), 3, axis=2)
    hd = C // n_head
    q = q.reshape(B, T, n_head, hd).transpose(0, 2, 1, 3)
    k = k.reshape(B, T, n_head, hd).transpose(0, 2, 1, 3)
    v = v.reshape(B, T, n_head, hd).transpose(0, 2, 1, 3)
    s = jnp.einsum("bhqd,bhkd->bhqk", q, k) / math.sqrt(hd)
    mask = jnp.tril(jnp.ones((T, T), bool))
    s = jnp.where(mask, s, -1e30)
    p = jax.nn.softmax(s, axis=-1)
    y_ref = jnp.einsum("bhqk,bhkd->bhqd", p, v).transpose(0, 2, 1, 3).reshape(B, T, C)

    # 1) f32 compute path: validates structure / masking / online softmax
    #    (exact reciprocal is used automatically on this path).
    y_f32 = jax.block_until_ready(
        causal_self_attention_forward(x, params, n_head,
                                      compute_dtype=jnp.float32, block_q=128))
    assert y_f32.shape == (B, T, C), y_f32.shape
    assert jnp.allclose(y_f32, y_ref, atol=1e-2, rtol=1e-2), "f32 path mismatch vs reference"

    # 2) bf16 end-to-end path (performance default): looser tolerance expected
    #    from bf16 operands + bf16 qkv storage + approx reciprocal.
    y_bf16 = jax.block_until_ready(
        causal_self_attention_forward(x, params, n_head,
                                      compute_dtype=jnp.bfloat16, block_q=128))
    assert y_bf16.shape == (B, T, C), y_bf16.shape
    assert jnp.allclose(y_bf16.astype(jnp.float32), y_ref, atol=3e-2, rtol=3e-2), \
        "bf16 path mismatch vs reference"

    print("KERNEL_OK")
</pallas_src>

<mosaic_0001>
module attributes {stable_mosaic.version = 11 : i64} {
  func.func @_qkv_proj_kernel(%arg0: i32, %arg1: i32, %arg2: i32, %arg3: memref<256x128xf32, #tpu.memory_space<vmem>>, %arg4: memref<128x128xf32, #tpu.memory_space<vmem>>, %arg5: memref<1x128xf32, #tpu.memory_space<vmem>>, %arg6: memref<256x128xf32, #tpu.memory_space<vmem>>, %arg7: memref<256x128xf32, #tpu.memory_space<vmem>>) attributes {dimension_semantics = [#tpu.dimension_semantics<parallel>, #tpu.dimension_semantics<parallel>, #tpu.dimension_semantics<arbitrary>], iteration_bounds = array<i64: 2, 3, 1>, scalar_prefetch = 0 : i64, scratch_operands = 1 : i64, tpu.core_type = #tpu.core_type<tc>, window_params = [{transform_indices = @transform_0, window_bounds = array<i64: 256, 128>}, {transform_indices = @transform_1, window_bounds = array<i64: 128, 128>}, {transform_indices = @transform_2, window_bounds = array<i64: 1, 128>}, {transform_indices = @transform_3, window_bounds = array<i64: 256, 128>}]} {
    %c0_i32 = arith.constant 0 : i32
    %0 = arith.cmpi eq, %arg2, %c0_i32 : i32
    %1 = arith.extui %0 : i1 to i32
    %c0_i32_0 = arith.constant 0 : i32
    %2 = arith.cmpi ne, %1, %c0_i32_0 : i32
    scf.if %2 {
      %cst_10 = arith.constant 0.000000e+00 : f32
      %12 = vector.broadcast %cst_10 : f32 to vector<256x128xf32>
      %c0_11 = arith.constant 0 : index
      %c0_12 = arith.constant 0 : index
      %13 = vector.load %arg7[%c0_11, %c0_12] : memref<256x128xf32, #tpu.memory_space<vmem>>, vector<256x128xf32>
      tpu.vector_store %arg7[%c0_11, %c0_12], %12 {strides = array<i32>} : memref<256x128xf32, #tpu.memory_space<vmem>>, vector<256x128xf32>,
    } else {
    }
    %c0 = arith.constant 0 : index
    %c0_1 = arith.constant 0 : index
    %3 = vector.load %arg7[%c0, %c0_1] : memref<256x128xf32, #tpu.memory_space<vmem>>, vector<256x128xf32>
    %c0_2 = arith.constant 0 : index
    %c0_3 = arith.constant 0 : index
    %4 = vector.load %arg3[%c0_2, %c0_3] : memref<256x128xf32, #tpu.memory_space<vmem>>, vector<256x128xf32>
    %c0_4 = arith.constant 0 : index
    %c0_5 = arith.constant 0 : index
    %5 = vector.load %arg4[%c0_4, %c0_5] : memref<128x128xf32, #tpu.memory_space<vmem>>, vector<128x128xf32>
    %cst = arith.constant dense<0.000000e+00> : vector<256x128xf32>
    %6 = tpu.matmul %4, %5, %cst {dimension_numbers = #tpu.dot_dimension_numbers<[1], [0], [0], [1], [0, 0, 1, 1], [], []>} : vector<256x128xf32>, vector<128x128xf32>, vector<256x128xf32> -> vector<256x128xf32>
    %7 = arith.addf %3, %6 : vector<256x128xf32>
    %c0_6 = arith.constant 0 : index
    %c0_7 = arith.constant 0 : index
    %8 = vector.load %arg7[%c0_6, %c0_7] : memref<256x128xf32, #tpu.memory_space<vmem>>, vector<256x128xf32>
    tpu.vector_store %arg7[%c0_6, %c0_7], %7 {strides = array<i32>} : memref<256x128xf32, #tpu.memory_space<vmem>>, vector<256x128xf32>,
    %c0_i32_8 = arith.constant 0 : i32
    %9 = arith.cmpi eq, %arg2, %c0_i32_8 : i32
    %10 = arith.extui %9 : i1 to i32
    %c0_i32_9 = arith.constant 0 : i32
    %11 = arith.cmpi ne, %10, %c0_i32_9 : i32
    scf.if %11 {
      %c0_10 = arith.constant 0 : index
      %c0_11 = arith.constant 0 : index
      %12 = vector.load %arg7[%c0_10, %c0_11] : memref<256x128xf32, #tpu.memory_space<vmem>>, vector<256x128xf32>
      %c0_12 = arith.constant 0 : index
      %c0_13 = arith.constant 0 : index
      %13 = vector.load %arg5[%c0_12, %c0_13] : memref<1x128xf32, #tpu.memory_space<vmem>>, vector<1x128xf32>
      %14 = vector.broadcast %13 : vector<1x128xf32> to vector<256x128xf32>
      %15 = arith.addf %12, %14 : vector<256x128xf32>
      %c0_14 = arith.constant 0 : index
      %c0_15 = arith.constant 0 : index
      %16 = vector.load %arg6[%c0_14, %c0_15] : memref<256x128xf32, #tpu.memory_space<vmem>>, vector<256x128xf32>
      tpu.vector_store %arg6[%c0_14, %c0_15], %15 {strides = array<i32>} : memref<256x128xf32, #tpu.memory_space<vmem>>, vector<256x128xf32>,
    } else {
    }
    return
  }
  func.func @transform_0(%arg0: i32, %arg1: i32, %arg2: i32) -> (i32, i32) {
    %c0_i32 = arith.constant 0 : i32
    return %arg0, %arg2 : i32, i32
  }
  func.func @transform_1(%arg0: i32, %arg1: i32, %arg2: i32) -> (i32, i32) {
    %c0_i32 = arith.constant 0 : i32
    return %arg2, %arg1 : i32, i32
  }
  func.func @transform_2(%arg0: i32, %arg1: i32, %arg2: i32) -> (i32, i32) {
    %c0_i32 = arith.constant 0 : i32
    %c0_i32_0 = arith.constant 0 : i32
    return %c0_i32, %arg1 : i32, i32
  }
  func.func @transform_3(%arg0: i32, %arg1: i32, %arg2: i32) -> (i32, i32) {
    %c0_i32 = arith.constant 0 : i32
    return %arg0, %arg1 : i32, i32
  }
}

</mosaic_0001>

<llo_original>
// kernel: tpu_custom_call.1
$region0: #{tpu_custom_call.1}
  #allocation0 [shape = 'u32[]', space=smem, size = 0x4, offset = 0x4, fixed_abs, tag = 'smem constant byte address 0x4 - core index']
  #allocation1 [shape = 'u32[144,128]{1,0:T(1,128)}', space=vmem, size = 0x12000, scoped, tag = 'internal scratch']
  #allocation2 [shape = 'f32[256,128]{1,0:T(8,128)}', space=vmem, size = 0x20000, scoped, tag = 'scratch operand']
  %s0 = inlined_call_operand.hbm [shape: f32[512,128], index: 0, kind: input, shape index: {}]
  %s1 = inlined_call_operand.hbm [shape: f32[128,384], index: 1, kind: input, shape index: {}]
  %s2 = inlined_call_operand.vmem [shape: f32[1,384], index: 2, kind: input, shape index: {}]
  %s3 = inlined_call_operand.hbm [shape: f32[512,384], index: 3, kind: output, shape index: {}]
  %s4 = sld [smem:[#allocation0]]
  $region61: #{tpu_custom_call.1} parent=0
    _
  %s6 = ssub.s32 1, %s4
  %s7 = scalar_select 0, %s6, %s4
  $region1: #{tpu_custom_call.1} parent=0
    #allocation3 [shape = 'u8[262144]{0}', space=vmem, size = 0x40000, scoped, tag = 'input window, operand 0']
    #allocation4 [shape = 's32[2]{0}', space=sflag, size = 0x8, scoped, tag = 'scoped memory for tpu_custom_call.1']
    #allocation5 [shape = 's32[2]{0}', space=sflag, size = 0x8, scoped, tag = 'scoped memory for tpu_custom_call.1']
    #allocation6 [shape = 'u8[131072]{0}', space=vmem, size = 0x20000, scoped, tag = 'input window, operand 1']
    #allocation7 [shape = 's32[2]{0}', space=sflag, size = 0x8, scoped, tag = 'scoped memory for tpu_custom_call.1']
    #allocation8 [shape = 'u8[262144]{0}', space=vmem, size = 0x40000, scoped, tag = 'output window, operand 0']
    %8 = vsyncpa [#allocation4], 0
    %s9 = scalar_lea.sflag [#allocation4], 1
    %10 = vsyncpa %s9, 0
    %11 = vsyncpa [#allocation7], 0
    %s12 = scalar_lea.sflag [#allocation7], 1
    %13 = vsyncpa %s12, 0
    %14 = vsyncpa [#allocation5], 0
    %s15 = scalar_lea.sflag [#allocation5], 1
    %16 = vsyncpa %s15, 0
    loop: start=0, step=1, limit=8
    $region2: #{tpu_custom_call.1} parent=1 // loop_pre_header
      _
    $region3: #{tpu_custom_call.1} parent=1 // loop_header
      %s18 = sphi 0, %s22
      %p19 = scmp.ge.s32.totalorder %s18, 8
      %s25 = sphi 0, %s44
      %s26 = sphi 0, %s40
      %s27 = sphi 0, %s36
      %s28 = sphi 0, %s25
      %s29 = sphi 0, %s26
      %s30 = sphi 0, %s27
      %s31 = sphi 0, %s28
      %s32 = sphi 0, %s29
      %s33 = sphi 0, %s30
      %s49 = sphi 0, %s51
      %s52 = sphi 0, %s49
      %s53 = sphi 0, %s52
      %s69 = sphi 0, %s53
      %s77 = sphi 0, %s79
      %s80 = sphi 0, %s77
      %s81 = sphi 0, %s80
      %s97 = sphi 0, %s81
      %s103 = sphi 0, %s105
      %s106 = sphi 0, %s103
      %s107 = sphi 0, %s106
      %s123 = sphi 0, %s107
      %s131 = sphi 0, %s133
      %s134 = sphi 0, %s131
      %s135 = sphi 0, %s134
      %s151 = sphi 0, %s135
    $region4: #{tpu_custom_call.1} parent=1 // loop_header_branch
      %21 = sbr.rel (%p19) target = $region8
    $region5: #{tpu_custom_call.1} parent=1 // loop_body
      %s23 = ssub.s32 %s18, 1
      %s24 = ssub.s32 %s18, 2
      %s34 = sadd.s32 1, %s27
      %p35 = scmp.ge.s32.totalorder %s34, 1
      %s36 = scalar_select %p35, 0, %s34
      %s37 = sadd.s32 1, %s26
      %s38 = scalar_select %p35, %s37, %s26
      %p39 = scmp.ge.s32.totalorder %s38, 3
      %s40 = scalar_select %p39, 0, %s38
      %s41 = sadd.s32 1, %s25
      %s42 = scalar_select %p39, %s41, %s25
      %p43 = scmp.ge.s32.totalorder %s42, 2
      %s44 = scalar_select %p43, 0, %s42
      %s45 = ssub.s32 %s25, %s44
      %s46 = ssub.s32 %s27, %s36
      %s47 = sor.u32 %s45, %s46
      %p48 = scmp.eq.s32.totalorder %s47, 0
      %s50 = sadd.s32 %s49, 1
      %s51 = scalar_select %p48, %s49, %s50
      %p54 = pneg %p48
      %p55 = scmp.eq.s32.totalorder %s18, 5
      %p56 = por %p54, %p55
      %p57 = scmp.ne.s32.totalorder %s49, %s52
      %p58 = scmp.eq.s32.totalorder %s18, 0
      %p59 = por %p57, %p58
      %p60 = scmp.ne.s32.totalorder %s49, %s52
      %p61 = scmp.eq.s32.totalorder %s23, 5
      %p62 = por %p60, %p61
      %p63 = scmp.ne.s32.totalorder %s52, %s53
      %p64 = scmp.eq.s32.totalorder %s23, 0
      %p65 = por %p63, %p64
      %p66 = scmp.ne.s32.totalorder %s52, %s53
      %p67 = scmp.eq.s32.totalorder %s24, 5
      %p68 = por %p66, %p67
      %p70 = scmp.ne.s32.totalorder %s53, %s69
      %p71 = scmp.eq.s32.totalorder %s24, 0
      %p72 = por %p70, %p71
      %s73 = ssub.s32 %s27, %s36
      %s74 = ssub.s32 %s26, %s40
      %s75 = sor.u32 %s73, %s74
      %p76 = scmp.eq.s32.totalorder %s75, 0
      %s78 = sadd.s32 %s77, 1
      %s79 = scalar_select %p76, %s77, %s78
      %p82 = pneg %p76
      %p83 = scmp.eq.s32.totalorder %s18, 5
      %p84 = por %p82, %p83
      %p85 = scmp.ne.s32.totalorder %s77, %s80
      %p86 = scmp.eq.s32.totalorder %s18, 0
      %p87 = por %p85, %p86
      %p88 = scmp.ne.s32.totalorder %s77, %s80
      %p89 = scmp.eq.s32.totalorder %s23, 5
      %p90 = por %p88, %p89
      %p91 = scmp.ne.s32.totalorder %s80, %s81
      %p92 = scmp.eq.s32.totalorder %s23, 0
      %p93 = por %p91, %p92
      %p94 = scmp.ne.s32.totalorder %s80, %s81
      %p95 = scmp.eq.s32.totalorder %s24, 5
      %p96 = por %p94, %p95
      %p98 = scmp.ne.s32.totalorder %s81, %s97
      %p99 = scmp.eq.s32.totalorder %s24, 0
      %p100 = por %p98, %p99
      %s101 = ssub.s32 %s26, %s40
      %p102 = scmp.eq.s32.totalorder %s101, 0
      %s104 = sadd.s32 %s103, 1
      %s105 = scalar_select %p102, %s103, %s104
      %p108 = pneg %p102
      %p109 = scmp.eq.s32.totalorder %s18, 5
      %p110 = por %p108, %p109
      %p111 = scmp.ne.s32.totalorder %s103, %s106
      %p112 = scmp.eq.s32.totalorder %s18, 0
      %p113 = por %p111, %p112
      %p114 = scmp.ne.s32.totalorder %s103, %s106
      %p115 = scmp.eq.s32.totalorder %s23, 5
      %p116 = por %p114, %p115
      %p117 = scmp.ne.s32.totalorder %s106, %s107
      %p118 = scmp.eq.s32.totalorder %s23, 0
      %p119 = por %p117, %p118
      %p120 = scmp.ne.s32.totalorder %s106, %s107
      %p121 = scmp.eq.s32.totalorder %s24, 5
      %p122 = por %p120, %p121
      %p124 = scmp.ne.s32.totalorder %s107, %s123
      %p125 = scmp.eq.s32.totalorder %s24, 0
      %p126 = por %p124, %p125
      %s127 = ssub.s32 %s25, %s44
      %s128 = ssub.s32 %s26, %s40
      %s129 = sor.u32 %s127, %s128
      %p130 = scmp.eq.s32.totalorder %s129, 0
      %s132 = sadd.s32 %s131, 1
      %s133 = scalar_select %p130, %s131, %s132
      %p136 = pneg %p130
      %p137 = scmp.eq.s32.totalorder %s18, 5
      %p138 = por %p136, %p137
      %p139 = scmp.ne.s32.totalorder %s131, %s134
      %p140 = scmp.eq.s32.totalorder %s18, 0
      %p141 = por %p139, %p140
      %p142 = scmp.ne.s32.totalorder %s131, %s134
      %p143 = scmp.eq.s32.totalorder %s23, 5
      %p144 = por %p142, %p143
      %p145 = scmp.ne.s32.totalorder %s134, %s135
      %p146 = scmp.eq.s32.totalorder %s23, 0
      %p147 = por %p145, %p146
      %p148 = scmp.ne.s32.totalorder %s134, %s135
      %p149 = scmp.eq.s32.totalorder %s24, 5
      %p150 = por %p148, %p149
      %p152 = scmp.ne.s32.totalorder %s135, %s151
      %p153 = scmp.eq.s32.totalorder %s24, 0
      %p154 = por %p152, %p153
      %p155 = scmp.le.s32.totalorder 1, %s18
      %p156 = scmp.lt.s32.totalorder %s18, 7
      %p157 = pnand %p155, %p156
      %p158 = pneg %p157
      // Predicated region
      $region9: #{tpu_custom_call.1} parent=5 // pred_check
        _
      $region10: #{tpu_custom_call.1} parent=5 // pred_check_branch
        %160 = sbr.rel (%p157) target = $region12
      $region11: #{tpu_custom_call.1} parent=5 // pred_region
        %s161 = ssub.s32 %s18, 1
      $region12: #{tpu_custom_call.1} parent=5 // pred_fallthru
        _
      %p162 = scmp.lt.s32.totalorder %s18, 6
      // Predicated region
      $region13: #{tpu_custom_call.1} parent=5 // pred_check
        %p163 = pneg %p162
      $region14: #{tpu_custom_call.1} parent=5 // pred_check_branch
        %165 = sbr.rel (%p163) target = $region16
      $region15: #{tpu_custom_call.1} parent=5 // pred_region
        // Predicated region
        $region17: #{tpu_custom_call.1} parent=15 // pred_check
          %p166 = pneg %p59
        $region18: #{tpu_custom_call.1} parent=15 // pred_check_branch
          %168 = sbr.rel (%p166) target = $region20
        $region19: #{tpu_custom_call.1} parent=15 // pred_region
          %s169 = sand.u32 %s49, 1
          %s170 = scalar_lea.sflag [#allocation4], %s169
          %s171 = sand.u32 %s49, 1
          %s172 = smul.addr %s171, 256
          %s173 = scalar_lea.vmem [#allocation3], %s172
          %s174 = smul.u32 32, %s25
          %s176 = ssub.s32 4096, 4096
          %177 = vsyncadd %s170, %s176
          %s178 = sadd.s32 %s27, %s174
          %s179 = smul.addr %s178, 128
          %s180 = scalar_lea.hbm %s0, %s179
          %s181 = sshll.u32 %s173, 4
          %s182 = int_to_ptr.vmem [resolvable:$true] %s181
          %187 = dma.hbm_to_vmem [thread:$0]  %s180, 4096, %s182, %s170, 128, 128, 8
        $region20: #{tpu_custom_call.1} parent=15 // pred_fallthru
          _
        // Predicated region
        $region21: #{tpu_custom_call.1} parent=15 // pred_check
          %p188 = pneg %p87
        $region22: #{tpu_custom_call.1} parent=15 // pred_check_branch
          %190 = sbr.rel (%p188) target = $region24
        $region23: #{tpu_custom_call.1} parent=15 // pred_region
          %s191 = sand.u32 %s77, 1
          %s192 = scalar_lea.sflag [#allocation7], %s191
          %s193 = sand.u32 %s77, 1
          %s194 = smul.addr %s193, 128
          %s195 = scalar_lea.vmem [#allocation6], %s194
          %s196 = smul.u32 16, %s27
          %s198 = ssub.s32 2048, 2048
          %199 = vsyncadd %s192, %s198
          %s200 = smul.addr %s196, 3
          %s201 = sadd.s32 %s26, %s200
          %s202 = smul.addr %s201, 128
          %s203 = scalar_lea.hbm %s1, %s202
          %s204 = sshll.u32 %s195, 4
          %s205 = int_to_ptr.vmem [resolvable:$true] %s204
          %210 = dma.hbm_to_vmem [thread:$0]  %s203, 2048, %s205, %s192, 384, 128, 8
        $region24: #{tpu_custom_call.1} parent=15 // pred_fallthru
          _
        // Predicated region
        $region25: #{tpu_custom_call.1} parent=15 // pred_check
          %p211 = pneg %p113
        $region26: #{tpu_custom_call.1} parent=15 // pred_check_branch
          %213 = sbr.rel (%p211) target = $region28
        $region27: #{tpu_custom_call.1} parent=15 // pred_region
          %p214 = scmp.lt.s32.totalorder %s26, 2
          %s215 = scalar_select %p214, %s26, 2
          %s216 = scalar_lea.vmem %s2, %s215
        $region28: #{tpu_custom_call.1} parent=15 // pred_fallthru
          _
      $region16: #{tpu_custom_call.1} parent=5 // pred_fallthru
        _
      %p217 = scmp.le.s32.totalorder 1, %s18
      %p218 = scmp.lt.s32.totalorder %s18, 7
      %p219 = pnand %p217, %p218
      %p220 = pneg %p219
      // Predicated region
      $region29: #{tpu_custom_call.1} parent=5 // pred_check
        _
      $region30: #{tpu_custom_call.1} parent=5 // pred_check_branch
        %222 = sbr.rel (%p219) target = $region32
      $region31: #{tpu_custom_call.1} parent=5 // pred_region
        %s223 = ssub.s32 %s18, 1
        %s224 = sand.u32 %s52, 1
        %s225 = scalar_lea.sflag [#allocation4], %s224
        %s226 = sand.u32 %s52, 1
        %s227 = smul.addr %s226, 256
        %s228 = scalar_lea.vmem [#allocation3], %s227
        // Predicated region
        $region33: #{tpu_custom_call.1} parent=31 // pred_check
          %p229 = pneg %p65
        $region34: #{tpu_custom_call.1} parent=31 // pred_check_branch
          %231 = sbr.rel (%p229) target = $region36
        $region35: #{tpu_custom_call.1} parent=31 // pred_region
          %232 = dma.done %s225, 4096
        $region36: #{tpu_custom_call.1} parent=31 // pred_fallthru
          _
        %s233 = sand.u32 %s80, 1
        %s234 = scalar_lea.sflag [#allocation7], %s233
        %s235 = sand.u32 %s80, 1
        %s236 = smul.addr %s235, 128
        %s237 = scalar_lea.vmem [#allocation6], %s236
        // Predicated region
        $region37: #{tpu_custom_call.1} parent=31 // pred_check
          %p238 = pneg %p93
        $region38: #{tpu_custom_call.1} parent=31 // pred_check_branch
          %240 = sbr.rel (%p238) target = $region40
        $region39: #{tpu_custom_call.1} parent=31 // pred_region
          %241 = dma.done %s234, 2048
        $region40: #{tpu_custom_call.1} parent=31 // pred_fallthru
          _
        %s242 = sand.u32 %s52, 1
        %s243 = scalar_lea.sflag [#allocation4], %s242
        %s244 = sand.u32 %s52, 1
        %s245 = smul.addr %s244, 256
        %s246 = scalar_lea.vmem [#allocation3], %s245
        %p247 = pneg %p65
        %p248 = pneg %p62
        %s249 = sand.u32 %s80, 1
        %s250 = scalar_lea.sflag [#allocation7], %s249
        %s251 = sand.u32 %s80, 1
        %s252 = smul.addr %s251, 128
        %s253 = scalar_lea.vmem [#allocation6], %s252
        %p254 = pneg %p93
        %p255 = pneg %p90
        %p256 = scmp.lt.s32.totalorder %s29, 2
        %s257 = scalar_select %p256, %s29, 2
        %s258 = scalar_lea.vmem %s2, %s257
        %p259 = pneg %p119
        %p260 = pneg %p116
        %p261 = pneg %p147
        %p262 = pneg %p144
        %s263 = sand.u32 %s134, 1
        %s264 = scalar_lea.sflag [#allocation5], %s263
        %s265 = sand.u32 %s134, 1
        %s266 = smul.addr %s265, 256
        %s267 = scalar_lea.vmem [#allocation8], %s266
        %s268 = smul.u32 32, %s28
        %s269 = smul.u32 16, %s30
        %p270 = scmp.lt.s32.totalorder %s29, 2
        %s271 = scalar_select %p270, %s29, 2
        %s272 = scalar_lea.vmem %s2, %s271
        %s273 = smul.u32 32, %s28
        %p274 = scmp.eq.s32.totalorder %s30, 0
        // Predicated region
        $region41: #{tpu_custom_call.1} parent=31 // pred_check
          %p275 = pneg %p274
        $region42: #{tpu_custom_call.1} parent=31 // pred_check_branch
          %277 = sbr.rel (%p275) target = $region44
        $region43: #{tpu_custom_call.1} parent=31 // pred_region
          %278 = vst [vmem:[#allocation2] sm:$0xff] 0.0
          %279 = vst [vmem:[#allocation2 + $0x8] sm:$0xff] 0.0
          %280 = vst [vmem:[#allocation2 + $0x10] sm:$0xff] 0.0
          %281 = vst [vmem:[#allocation2 + $0x18] sm:$0xff] 0.0
          %282 = vst [vmem:[#allocation2 + $0x20] sm:$0xff] 0.0
          %283 = vst [vmem:[#allocation2 + $0x28] sm:$0xff] 0.0
          %284 = vst [vmem:[#allocation2 + $0x30] sm:$0xff] 0.0
          %285 = vst [vmem:[#allocation2 + $0x38] sm:$0xff] 0.0
          %286 = vst [vmem:[#allocation2 + $0x40] sm:$0xff] 0.0
          %287 = vst [vmem:[#allocation2 + $0x48] sm:$0xff] 0.0
          %288 = vst [vmem:[#allocation2 + $0x50] sm:$0xff] 0.0
          %289 = vst [vmem:[#allocation2 + $0x58] sm:$0xff] 0.0
          %290 = vst [vmem:[#allocation2 + $0x60] sm:$0xff] 0.0
          %291 = vst [vmem:[#allocation2 + $0x68] sm:$0xff] 0.0
          %292 = vst [vmem:[#allocation2 + $0x70] sm:$0xff] 0.0
          %293 = vst [vmem:[#allocation2 + $0x78] sm:$0xff] 0.0
          %294 = vst [vmem:[#allocation2 + $0x80] sm:$0xff] 0.0
          %295 = vst [vmem:[#allocation2 + $0x88] sm:$0xff] 0.0
          %296 = vst [vmem:[#allocation2 + $0x90] sm:$0xff] 0.0
          %297 = vst [vmem:[#allocation2 + $0x98] sm:$0xff] 0.0
          %298 = vst [vmem:[#allocation2 + $0xa0] sm:$0xff] 0.0
          %299 = vst [vmem:[#allocation2 + $0xa8] sm:$0xff] 0.0
          %300 = vst [vmem:[#allocation2 + $0xb0] sm:$0xff] 0.0
          %301 = vst [vmem:[#allocation2 + $0xb8] sm:$0xff] 0.0
          %302 = vst [vmem:[#allocation2 + $0xc0] sm:$0xff] 0.0
          %303 = vst [vmem:[#allocation2 + $0xc8] sm:$0xff] 0.0
          %304 = vst [vmem:[#allocation2 + $0xd0] sm:$0xff] 0.0
          %305 = vst [vmem:[#allocation2 + $0xd8] sm:$0xff] 0.0
          %306 = vst [vmem:[#allocation2 + $0xe0] sm:$0xff] 0.0
          %307 = vst [vmem:[#allocation2 + $0xe8] sm:$0xff] 0.0
          %308 = vst [vmem:[#allocation2 + $0xf0] sm:$0xff] 0.0
          %309 = vst [vmem:[#allocation2 + $0xf8] sm:$0xff] 0.0
        $region44: #{tpu_custom_call.1} parent=31 // pred_fallthru
          _
        %v310 = vld [vmem:[#allocation2] sm:$0xff]
        %v311 = vld [vmem:[#allocation2 + $0x8] sm:$0xff]
        %v312 = vld [vmem:[#allocation2 + $0x10] sm:$0xff]
        %v313 = vld [vmem:[#allocation2 + $0x18] sm:$0xff]
        %v314 = vld [vmem:[#allocation2 + $0x20] sm:$0xff]
        %v315 = vld [vmem:[#allocation2 + $0x28] sm:$0xff]
        %v316 = vld [vmem:[#allocation2 + $0x30] sm:$0xff]
        %v317 = vld [vmem:[#allocation2 + $0x38] sm:$0xff]
        %v318 = vld [vmem:[#allocation2 + $0x40] sm:$0xff]
        %v319 = vld [vmem:[#allocation2 + $0x48] sm:$0xff]
        %v320 = vld [vmem:[#allocation2 + $0x50] sm:$0xff]
        %v321 = vld [vmem:[#allocation2 + $0x58] sm:$0xff]
        %v322 = vld [vmem:[#allocation2 + $0x60] sm:$0xff]
        %v323 = vld [vmem:[#allocation2 + $0x68] sm:$0xff]
        %v324 = vld [vmem:[#allocation2 + $0x70] sm:$0xff]
        %v325 = vld [vmem:[#allocation2 + $0x78] sm:$0xff]
        %v326 = vld [vmem:[#allocation2 + $0x80] sm:$0xff]
        %v327 = vld [vmem:[#allocation2 + $0x88] sm:$0xff]
        %v328 = vld [vmem:[#allocation2 + $0x90] sm:$0xff]
        %v329 = vld [vmem:[#allocation2 + $0x98] sm:$0xff]
        %v330 = vld [vmem:[#allocation2 + $0xa0] sm:$0xff]
        %v331 = vld [vmem:[#allocation2 + $0xa8] sm:$0xff]
        %v332 = vld [vmem:[#allocation2 + $0xb0] sm:$0xff]
        %v333 = vld [vmem:[#allocation2 + $0xb8] sm:$0xff]
        %v334 = vld [vmem:[#allocation2 + $0xc0] sm:$0xff]
        %v335 = vld [vmem:[#allocation2 + $0xc8] sm:$0xff]
        %v336 = vld [vmem:[#allocation2 + $0xd0] sm:$0xff]
        %v337 = vld [vmem:[#allocation2 + $0xd8] sm:$0xff]
        %v338 = vld [vmem:[#allocation2 + $0xe0] sm:$0xff]
        %v339 = vld [vmem:[#allocation2 + $0xe8] sm:$0xff]
        %v340 = vld [vmem:[#allocation2 + $0xf0] sm:$0xff]
        %v341 = vld [vmem:[#allocation2 + $0xf8] sm:$0xff]
        %v342 = vld [vmem:[%s228] sm:$0xff]
        %v343 = vld [vmem:[%s228 + $0x8] sm:$0xff]
        %v344 = vld [vmem:[%s228 + $0x10] sm:$0xff]
        %v345 = vld [vmem:[%s228 + $0x18] sm:$0xff]
        %v346 = vld [vmem:[%s228 + $0x20] sm:$0xff]
        %v347 = vld [vmem:[%s228 + $0x28] sm:$0xff]
        %v348 = vld [vmem:[%s228 + $0x30] sm:$0xff]
        %v349 = vld [vmem:[%s228 + $0x38] sm:$0xff]
        %v350 = vld [vmem:[%s228 + $0x40] sm:$0xff]
        %v351 = vld [vmem:[%s228 + $0x48] sm:$0xff]
        %v352 = vld [vmem:[%s228 + $0x50] sm:$0xff]
        %v353 = vld [vmem:[%s228 + $0x58] sm:$0xff]
        %v354 = vld [vmem:[%s228 + $0x60] sm:$0xff]
        %v355 = vld [vmem:[%s228 + $0x68] sm:$0xff]
        %v356 = vld [vmem:[%s228 + $0x70] sm:$0xff]
        %v357 = vld [vmem:[%s228 + $0x78] sm:$0xff]
        %v358 = vld [vmem:[%s228 + $0x80] sm:$0xff]
        %v359 = vld [vmem:[%s228 + $0x88] sm:$0xff]
        %v360 = vld [vmem:[%s228 + $0x90] sm:$0xff]
        %v361 = vld [vmem:[%s228 + $0x98] sm:$0xff]
        %v362 = vld [vmem:[%s228 + $0xa0] sm:$0xff]
        %v363 = vld [vmem:[%s228 + $0xa8] sm:$0xff]
        %v364 = vld [vmem:[%s228 + $0xb0] sm:$0xff]
        %v365 = vld [vmem:[%s228 + $0xb8] sm:$0xff]
        %v366 = vld [vmem:[%s228 + $0xc0] sm:$0xff]
        %v367 = vld [vmem:[%s228 + $0xc8] sm:$0xff]
        %v368 = vld [vmem:[%s228 + $0xd0] sm:$0xff]
        %v369 = vld [vmem:[%s228 + $0xd8] sm:$0xff]
        %v370 = vld [vmem:[%s228 + $0xe0] sm:$0xff]
        %v371 = vld [vmem:[%s228 + $0xe8] sm:$0xff]
        %v372 = vld [vmem:[%s228 + $0xf0] sm:$0xff]
        %v373 = vld [vmem:[%s228 + $0xf8] sm:$0xff]
        %v374 = vld [vmem:[%s237] sm:$0xff]
        %v375 = vld [vmem:[%s237 + $0x8] sm:$0xff]
        %v376 = vld [vmem:[%s237 + $0x10] sm:$0xff]
        %v377 = vld [vmem:[%s237 + $0x18] sm:$0xff]
        %v378 = vld [vmem:[%s237 + $0x20] sm:$0xff]
        %v379 = vld [vmem:[%s237 + $0x28] sm:$0xff]
        %v380 = vld [vmem:[%s237 + $0x30] sm:$0xff]
        %v381 = vld [vmem:[%s237 + $0x38] sm:$0xff]
        %v382 = vld [vmem:[%s237 + $0x40] sm:$0xff]
        %v383 = vld [vmem:[%s237 + $0x48] sm:$0xff]
        %v384 = vld [vmem:[%s237 + $0x50] sm:$0xff]
        %v385 = vld [vmem:[%s237 + $0x58] sm:$0xff]
        %v386 = vld [vmem:[%s237 + $0x60] sm:$0xff]
        %v387 = vld [vmem:[%s237 + $0x68] sm:$0xff]
        %v388 = vld [vmem:[%s237 + $0x70] sm:$0xff]
        %v389 = vld [vmem:[%s237 + $0x78] sm:$0xff]
        %390 = vmatprep.subr.mxu0 0.0
        %391 = vmatpush1.msra.mxu0 %v389
        %392 = vmatprep.subr.mxu0 0.0
        %393 = vmatpush1.msra.mxu0 %v388
        %394 = vmatprep.subr.mxu0 0.0
        %395 = vmatpush1.msra.mxu0 %v387
        %396 = vmatprep.subr.mxu0 0.0
        %397 = vmatpush1.msra.mxu0 %v386
        %398 = vmatprep.subr.mxu0 0.0
        %399 = vmatpush1.msra.mxu0 %v385
        %400 = vmatprep.subr.mxu0 0.0
        %401 = vmatpush1.msra.mxu0 %v384
        %402 = vmatprep.subr.mxu0 0.0
        %403 = vmatpush1.msra.mxu0 %v383
        %404 = vmatprep.subr.mxu0 0.0
        %405 = vmatpush1.msra.mxu0 %v382
        %406 = vmatprep.subr.mxu0 0.0
        %407 = vmatpush1.msra.mxu0 %v381
        %408 = vmatprep.subr.mxu0 0.0
        %409 = vmatpush1.msra.mxu0 %v380
        %410 = vmatprep.subr.mxu0 0.0
        %411 = vmatpush1.msra.mxu0 %v379
        %412 = vmatprep.subr.mxu0 0.0
        %413 = vmatpush1.msra.mxu0 %v378
        %414 = vmatprep.subr.mxu0 0.0
        %415 = vmatpush1.msra.mxu0 %v377
        %416 = vmatprep.subr.mxu0 0.0
        %417 = vmatpush1.msra.mxu0 %v376
        %418 = vmatprep.subr.mxu0 0.0
        %419 = vmatpush1.msra.mxu0 %v375
        %420 = vmatprep.subr.mxu0 0.0
        %421 = vmatpush1.msra.mxu0 %v374
        %422 = vmatprep.subr.mxu0 0.0
        %423 = vmatpush2.msra.mxu0 0.0
        %424 = vmatprep.subr.mxu0 0.0
        %425 = vmatpush2.msra.mxu0 0.0
        %426 = vmatprep.subr.mxu0 0.0
        %427 = vmatpush2.msra.mxu0 0.0
        %428 = vmatprep.subr.mxu0 0.0
        %429 = vmatpush2.msra.mxu0 0.0
        %430 = vmatprep.subr.mxu0 0.0
        %431 = vmatpush2.msra.mxu0 0.0
        %432 = vmatprep.subr.mxu0 0.0
        %433 = vmatpush2.msra.mxu0 0.0
        %434 = vmatprep.subr.mxu0 0.0
        %435 = vmatpush2.msra.mxu0 0.0
        %436 = vmatprep.subr.mxu0 0.0
        %437 = vmatpush2.msra.mxu0 0.0
        %438 = vmatprep.subr.mxu0 0.0
        %439 = vmatpush2.msra.mxu0 0.0
        %440 = vmatprep.subr.mxu0 0.0
        %441 = vmatpush2.msra.mxu0 0.0
        %442 = vmatprep.subr.mxu0 0.0
        %443 = vmatpush2.msra.mxu0 0.0
        %444 = vmatprep.subr.mxu0 0.0
        %445 = vmatpush2.msra.mxu0 0.0
        %446 = vmatprep.subr.mxu0 0.0
        %447 = vmatpush2.msra.mxu0 0.0
        %448 = vmatprep.subr.mxu0 0.0
        %449 = vmatpush2.msra.mxu0 0.0
        %450 = vmatprep.subr.mxu0 0.0
        %451 = vmatpush2.msra.mxu0 0.0
        %452 = vmatprep.subr.mxu0 0.0
        %453 = vmatpush2.msra.mxu0 0.0
        %454 = vmatprep.mubr.f32.mxu0 0.0
        %455 = vmatmul.mubr.f32.gmra.mxu0 %v342
        %v456 = vpop.f32.mrf.mxu0
        %v457 = vadd.f32 0.0, %v456
        %v458 = vpop.f32.mrf.mxu0
        %459 = vmatprep.mubr.f32.mxu0 0.0
        %460 = vmatmul.mubr.f32.gmra.mxu0 %v343
        %v461 = vpop.f32.mrf.mxu0
        %v462 = vadd.f32 0.0, %v461
        %v463 = vpop.f32.mrf.mxu0
        %464 = vmatprep.mubr.f32.mxu0 0.0
        %465 = vmatmul.mubr.f32.gmra.mxu0 %v344
        %v466 = vpop.f32.mrf.mxu0
        %v467 = vadd.f32 0.0, %v466
        %v468 = vpop.f32.mrf.mxu0
        %469 = vmatprep.mubr.f32.mxu0 0.0
        %470 = vmatmul.mubr.f32.gmra.mxu0 %v345
        %v471 = vpop.f32.mrf.mxu0
        %v472 = vadd.f32 0.0, %v471
        %v473 = vpop.f32.mrf.mxu0
        %474 = vmatprep.mubr.f32.mxu0 0.0
        %475 = vmatmul.mubr.f32.gmra.mxu0 %v346
        %v476 = vpop.f32.mrf.mxu0
        %v477 = vadd.f32 0.0, %v476
        %v478 = vpop.f32.mrf.mxu0
        %479 = vmatprep.mubr.f32.mxu0 0.0
        %480 = vmatmul.mubr.f32.gmra.mxu0 %v347
        %v481 = vpop.f32.mrf.mxu0
        %v482 = vadd.f32 0.0, %v481
        %v483 = vpop.f32.mrf.mxu0
        %484 = vmatprep.mubr.f32.mxu0 0.0
        %485 = vmatmul.mubr.f32.gmra.mxu0 %v348
        %v486 = vpop.f32.mrf.mxu0
        %v487 = vadd.f32 0.0, %v486
        %v488 = vpop.f32.mrf.mxu0
        %489 = vmatprep.mubr.f32.mxu0 0.0
        %490 = vmatmul.mubr.f32.gmra.mxu0 %v349
        %v491 = vpop.f32.mrf.mxu0
        %v492 = vadd.f32 0.0, %v491
        %v493 = vpop.f32.mrf.mxu0
        %494 = vmatprep.mubr.f32.mxu0 0.0
        %495 = vmatmul.mubr.f32.gmra.mxu0 %v350
        %v496 = vpop.f32.mrf.mxu0
        %v497 = vadd.f32 0.0, %v496
        %v498 = vpop.f32.mrf.mxu0
        %499 = vmatprep.mubr.f32.mxu0 0.0
        %500 = vmatmul.mubr.f32.gmra.mxu0 %v351
        %v501 = vpop.f32.mrf.mxu0
        %v502 = vadd.f32 0.0, %v501
        %v503 = vpop.f32.mrf.mxu0
        %504 = vmatprep.mubr.f32.mxu0 0.0
        %505 = vmatmul.mubr.f32.gmra.mxu0 %v352
        %v506 = vpop.f32.mrf.mxu0
        %v507 = vadd.f32 0.0, %v506
        %v508 = vpop.f32.mrf.mxu0
        %509 = vmatprep.mubr.f32.mxu0 0.0
        %510 = vmatmul.mubr.f32.gmra.mxu0 %v353
        %v511 = vpop.f32.mrf.mxu0
        %v512 = vadd.f32 0.0, %v511
        %v513 = vpop.f32.mrf.mxu0
        %514 = vmatprep.mubr.f32.mxu0 0.0
        %515 = vmatmul.mubr.f32.gmra.mxu0 %v354
        %v516 = vpop.f32.mrf.mxu0
        %v517 = vadd.f32 0.0, %v516
        %v518 = vpop.f32.mrf.mxu0
        %519 = vmatprep.mubr.f32.mxu0 0.0
        %520 = vmatmul.mubr.f32.gmra.mxu0 %v355
        %v521 = vpop.f32.mrf.mxu0
        %v522 = vadd.f32 0.0, %v521
        %v523 = vpop.f32.mrf.mxu0
        %524 = vmatprep.mubr.f32.mxu0 0.0
        %525 = vmatmul.mubr.f32.gmra.mxu0 %v356
        %v526 = vpop.f32.mrf.mxu0
        %v527 = vadd.f32 0.0, %v526
        %v528 = vpop.f32.mrf.mxu0
        %529 = vmatprep.mubr.f32.mxu0 0.0
        %530 = vmatmul.mubr.f32.gmra.mxu0 %v357
        %v531 = vpop.f32.mrf.mxu0
        %v532 = vadd.f32 0.0, %v531
        %v533 = vpop.f32.mrf.mxu0
        %534 = vmatprep.mubr.f32.mxu0 0.0
        %535 = vmatmul.mubr.f32.gmra.mxu0 %v358
        %v536 = vpop.f32.mrf.mxu0
        %v537 = vadd.f32 0.0, %v536
        %v538 = vpop.f32.mrf.mxu0
        %539 = vmatprep.mubr.f32.mxu0 0.0
        %540 = vmatmul.mubr.f32.gmra.mxu0 %v359
        %v541 = vpop.f32.mrf.mxu0
        %v542 = vadd.f32 0.0, %v541
        %v543 = vpop.f32.mrf.mxu0
        %544 = vmatprep.mubr.f32.mxu0 0.0
        %545 = vmatmul.mubr.f32.gmra.mxu0 %v360
        %v546 = vpop.f32.mrf.mxu0
        %v547 = vadd.f32 0.0, %v546
        %v548 = vpop.f32.mrf.mxu0
        %549 = vmatprep.mubr.f32.mxu0 0.0
        %550 = vmatmul.mubr.f32.gmra.mxu0 %v361
        %v551 = vpop.f32.mrf.mxu0
        %v552 = vadd.f32 0.0, %v551
        %v553 = vpop.f32.mrf.mxu0
        %554 = vmatprep.mubr.f32.mxu0 0.0
        %555 = vmatmul.mubr.f32.gmra.mxu0 %v362
        %v556 = vpop.f32.mrf.mxu0
        %v557 = vadd.f32 0.0, %v556
        %v558 = vpop.f32.mrf.mxu0
        %559 = vmatprep.mubr.f32.mxu0 0.0
        %560 = vmatmul.mubr.f32.gmra.mxu0 %v363
        %v561 = vpop.f32.mrf.mxu0
        %v562 = vadd.f32 0.0, %v561
        %v563 = vpop.f32.mrf.mxu0
        %564 = vmatprep.mubr.f32.mxu0 0.0
        %565 = vmatmul.mubr.f32.gmra.mxu0 %v364
        %v566 = vpop.f32.mrf.mxu0
        %v567 = vadd.f32 0.0, %v566
        %v568 = vpop.f32.mrf.mxu0
        %569 = vmatprep.mubr.f32.mxu0 0.0
        %570 = vmatmul.mubr.f32.gmra.mxu0 %v365
        %v571 = vpop.f32.mrf.mxu0
        %v572 = vadd.f32 0.0, %v571
        %v573 = vpop.f32.mrf.mxu0
        %574 = vmatprep.mubr.f32.mxu0 0.0
        %575 = vmatmul.mubr.f32.gmra.mxu0 %v366
        %v576 = vpop.f32.mrf.mxu0
        %v577 = vadd.f32 0.0, %v576
        %v578 = vpop.f32.mrf.mxu0
        %579 = vmatprep.mubr.f32.mxu0 0.0
        %580 = vmatmul.mubr.f32.gmra.mxu0 %v367
        %v581 = vpop.f32.mrf.mxu0
        %v582 = vadd.f32 0.0, %v581
        %v583 = vpop.f32.mrf.mxu0
        %584 = vmatprep.mubr.f32.mxu0 0.0
        %585 = vmatmul.mubr.f32.gmra.mxu0 %v368
        %v586 = vpop.f32.mrf.mxu0
        %v587 = vadd.f32 0.0, %v586
        %v588 = vpop.f32.mrf.mxu0
        %589 = vmatprep.mubr.f32.mxu0 0.0
        %590 = vmatmul.mubr.f32.gmra.mxu0 %v369
        %v591 = vpop.f32.mrf.mxu0
        %v592 = vadd.f32 0.0, %v591
        %v593 = vpop.f32.mrf.mxu0
        %594 = vmatprep.mubr.f32.mxu0 0.0
        %595 = vmatmul.mubr.f32.gmra.mxu0 %v370
        %v596 = vpop.f32.mrf.mxu0
        %v597 = vadd.f32 0.0, %v596
        %v598 = vpop.f32.mrf.mxu0
        %599 = vmatprep.mubr.f32.mxu0 0.0
        %600 = vmatmul.mubr.f32.gmra.mxu0 %v371
        %v601 = vpop.f32.mrf.mxu0
        %v602 = vadd.f32 0.0, %v601
        %v603 = vpop.f32.mrf.mxu0
        %604 = vmatprep.mubr.f32.mxu0 0.0
        %605 = vmatmul.mubr.f32.gmra.mxu0 %v372
        %v606 = vpop.f32.mrf.mxu0
        %v607 = vadd.f32 0.0, %v606
        %v608 = vpop.f32.mrf.mxu0
        %609 = vmatprep.mubr.f32.mxu0 0.0
        %610 = vmatmul.mubr.f32.gmra.mxu0 %v373
        %v611 = vpop.f32.mrf.mxu0
        %v612 = vadd.f32 0.0, %v611
        %v613 = vpop.f32.mrf.mxu0
        %614 = vdwg.mxu0
        %v615 = vadd.f32 %v310, %v457
        %v616 = vadd.f32 %v311, %v462
        %v617 = vadd.f32 %v312, %v467
        %v618 = vadd.f32 %v313, %v472
        %v619 = vadd.f32 %v314, %v477
        %v620 = vadd.f32 %v315, %v482
        %v621 = vadd.f32 %v316, %v487
        %v622 = vadd.f32 %v317, %v492
        %v623 = vadd.f32 %v318, %v497
        %v624 = vadd.f32 %v319, %v502
        %v625 = vadd.f32 %v320, %v507
        %v626 = vadd.f32 %v321, %v512
        %v627 = vadd.f32 %v322, %v517
        %v628 = vadd.f32 %v323, %v522
        %v629 = vadd.f32 %v324, %v527
        %v630 = vadd.f32 %v325, %v532
        %v631 = vadd.f32 %v326, %v537
        %v632 = vadd.f32 %v327, %v542
        %v633 = vadd.f32 %v328, %v547
        %v634 = vadd.f32 %v329, %v552
        %v635 = vadd.f32 %v330, %v557
        %v636 = vadd.f32 %v331, %v562
        %v637 = vadd.f32 %v332, %v567
        %v638 = vadd.f32 %v333, %v572
        %v639 = vadd.f32 %v334, %v577
        %v640 = vadd.f32 %v335, %v582
        %v641 = vadd.f32 %v336, %v587
        %v642 = vadd.f32 %v337, %v592
        %v643 = vadd.f32 %v338, %v597
        %v644 = vadd.f32 %v339, %v602
        %v645 = vadd.f32 %v340, %v607
        %v646 = vadd.f32 %v341, %v612
        %647 = vst [vmem:[#allocation2] sm:$0xff] %v615
        %648 = vst [vmem:[#allocation2 + $0x8] sm:$0xff] %v616
        %649 = vst [vmem:[#allocation2 + $0x10] sm:$0xff] %v617
        %650 = vst [vmem:[#allocation2 + $0x18] sm:$0xff] %v618
        %651 = vst [vmem:[#allocation2 + $0x20] sm:$0xff] %v619
        %652 = vst [vmem:[#allocation2 + $0x28] sm:$0xff] %v620
        %653 = vst [vmem:[#allocation2 + $0x30] sm:$0xff] %v621
        %654 = vst [vmem:[#allocation2 + $0x38] sm:$0xff] %v622
        %655 = vst [vmem:[#allocation2 + $0x40] sm:$0xff] %v623
        %656 = vst [vmem:[#allocation2 + $0x48] sm:$0xff] %v624
        %657 = vst [vmem:[#allocation2 + $0x50] sm:$0xff] %v625
        %658 = vst [vmem:[#allocation2 + $0x58] sm:$0xff] %v626
        %659 = vst [vmem:[#allocation2 + $0x60] sm:$0xff] %v627
        %660 = vst [vmem:[#allocation2 + $0x68] sm:$0xff] %v628
        %661 = vst [vmem:[#allocation2 + $0x70] sm:$0xff] %v629
        %662 = vst [vmem:[#allocation2 + $0x78] sm:$0xff] %v630
        %663 = vst [vmem:[#allocation2 + $0x80] sm:$0xff] %v631
        %664 = vst [vmem:[#allocation2 + $0x88] sm:$0xff] %v632
        %665 = vst [vmem:[#allocation2 + $0x90] sm:$0xff] %v633
        %666 = vst [vmem:[#allocation2 + $0x98] sm:$0xff] %v634
        %667 = vst [vmem:[#allocation2 + $0xa0] sm:$0xff] %v635
        %668 = vst [vmem:[#allocation2 + $0xa8] sm:$0xff] %v636
        %669 = vst [vmem:[#allocation2 + $0xb0] sm:$0xff] %v637
        %670 = vst [vmem:[#allocation2 + $0xb8] sm:$0xff] %v638
        %671 = vst [vmem:[#allocation2 + $0xc0] sm:$0xff] %v639
        %672 = vst [vmem:[#allocation2 + $0xc8] sm:$0xff] %v640
        %673 = vst [vmem:[#allocation2 + $0xd0] sm:$0xff] %v641
        %674 = vst [vmem:[#allocation2 + $0xd8] sm:$0xff] %v642
        %675 = vst [vmem:[#allocation2 + $0xe0] sm:$0xff] %v643
        %676 = vst [vmem:[#allocation2 + $0xe8] sm:$0xff] %v644
        %677 = vst [vmem:[#allocation2 + $0xf0] sm:$0xff] %v645
        %678 = vst [vmem:[#allocation2 + $0xf8] sm:$0xff] %v646
        // Predicated region
        $region45: #{tpu_custom_call.1} parent=31 // pred_check
          %p679 = pneg %p274
        $region46: #{tpu_custom_call.1} parent=31 // pred_check_branch
          %681 = sbr.rel (%p679) target = $region48
        $region47: #{tpu_custom_call.1} parent=31 // pred_region
          %v682 = vld [vmem:[#allocation2] sm:$0xff]
          %v683 = vld [vmem:[#allocation2 + $0x8] sm:$0xff]
          %v684 = vld [vmem:[#allocation2 + $0x10] sm:$0xff]
          %v685 = vld [vmem:[#allocation2 + $0x18] sm:$0xff]
          %v686 = vld [vmem:[#allocation2 + $0x20] sm:$0xff]
          %v687 = vld [vmem:[#allocation2 + $0x28] sm:$0xff]
          %v688 = vld [vmem:[#allocation2 + $0x30] sm:$0xff]
          %v689 = vld [vmem:[#allocation2 + $0x38] sm:$0xff]
          %v690 = vld [vmem:[#allocation2 + $0x40] sm:$0xff]
          %v691 = vld [vmem:[#allocation2 + $0x48] sm:$0xff]
          %v692 = vld [vmem:[#allocation2 + $0x50] sm:$0xff]
          %v693 = vld [vmem:[#allocation2 + $0x58] sm:$0xff]
          %v694 = vld [vmem:[#allocation2 + $0x60] sm:$0xff]
          %v695 = vld [vmem:[#allocation2 + $0x68] sm:$0xff]
          %v696 = vld [vmem:[#allocation2 + $0x70] sm:$0xff]
          %v697 = vld [vmem:[#allocation2 + $0x78] sm:$0xff]
          %v698 = vld [vmem:[#allocation2 + $0x80] sm:$0xff]
          %v699 = vld [vmem:[#allocation2 + $0x88] sm:$0xff]
          %v700 = vld [vmem:[#allocation2 + $0x90] sm:$0xff]
          %v701 = vld [vmem:[#allocation2 + $0x98] sm:$0xff]
          %v702 = vld [vmem:[#allocation2 + $0xa0] sm:$0xff]
          %v703 = vld [vmem:[#allocation2 + $0xa8] sm:$0xff]
          %v704 = vld [vmem:[#allocation2 + $0xb0] sm:$0xff]
          %v705 = vld [vmem:[#allocation2 + $0xb8] sm:$0xff]
          %v706 = vld [vmem:[#allocation2 + $0xc0] sm:$0xff]
          %v707 = vld [vmem:[#allocation2 + $0xc8] sm:$0xff]
          %v708 = vld [vmem:[#allocation2 + $0xd0] sm:$0xff]
          %v709 = vld [vmem:[#allocation2 + $0xd8] sm:$0xff]
          %v710 = vld [vmem:[#allocation2 + $0xe0] sm:$0xff]
          %v711 = vld [vmem:[#allocation2 + $0xe8] sm:$0xff]
          %v712 = vld [vmem:[#allocation2 + $0xf0] sm:$0xff]
          %v713 = vld [vmem:[#allocation2 + $0xf8] sm:$0xff]
          %v714 = vld [vmem:[%s272] sm:$0x1]
          %v716 = vlaneseq
          %v717 = vshrl.u32 %v716, 7
          %v718 = vsub.s32 0, %v717
          %v719 = vrot.slane %v714, %v718
          %v721 = vadd.f32 %v682, %v719
          %v722 = vadd.f32 %v683, %v719
          %v723 = vadd.f32 %v684, %v719
          %v724 = vadd.f32 %v685, %v719
          %v725 = vadd.f32 %v686, %v719
          %v726 = vadd.f32 %v687, %v719
          %v727 = vadd.f32 %v688, %v719
          %v728 = vadd.f32 %v689, %v719
          %v729 = vadd.f32 %v690, %v719
          %v730 = vadd.f32 %v691, %v719
          %v731 = vadd.f32 %v692, %v719
          %v732 = vadd.f32 %v693, %v719
          %v733 = vadd.f32 %v694, %v719
          %v734 = vadd.f32 %v695, %v719
          %v735 = vadd.f32 %v696, %v719
          %v736 = vadd.f32 %v697, %v719
          %v737 = vadd.f32 %v698, %v719
          %v738 = vadd.f32 %v699, %v719
          %v739 = vadd.f32 %v700, %v719
          %v740 = vadd.f32 %v701, %v719
          %v741 = vadd.f32 %v702, %v719
          %v742 = vadd.f32 %v703, %v719
          %v743 = vadd.f32 %v704, %v719
          %v744 = vadd.f32 %v705, %v719
          %v745 = vadd.f32 %v706, %v719
          %v746 = vadd.f32 %v707, %v719
          %v747 = vadd.f32 %v708, %v719
          %v748 = vadd.f32 %v709, %v719
          %v749 = vadd.f32 %v710, %v719
          %v750 = vadd.f32 %v711, %v719
          %v751 = vadd.f32 %v712, %v719
          %v752 = vadd.f32 %v713, %v719
          %753 = vst [vmem:[%s267] sm:$0xff] %v721
          %754 = vst [vmem:[%s267 + $0x8] sm:$0xff] %v722
          %755 = vst [vmem:[%s267 + $0x10] sm:$0xff] %v723
          %756 = vst [vmem:[%s267 + $0x18] sm:$0xff] %v724
          %757 = vst [vmem:[%s267 + $0x20] sm:$0xff] %v725
          %758 = vst [vmem:[%s267 + $0x28] sm:$0xff] %v726
          %759 = vst [vmem:[%s267 + $0x30] sm:$0xff] %v727
          %760 = vst [vmem:[%s267 + $0x38] sm:$0xff] %v728
          %761 = vst [vmem:[%s267 + $0x40] sm:$0xff] %v729
          %762 = vst [vmem:[%s267 + $0x48] sm:$0xff] %v730
          %763 = vst [vmem:[%s267 + $0x50] sm:$0xff] %v731
          %764 = vst [vmem:[%s267 + $0x58] sm:$0xff] %v732
          %765 = vst [vmem:[%s267 + $0x60] sm:$0xff] %v733
          %766 = vst [vmem:[%s267 + $0x68] sm:$0xff] %v734
          %767 = vst [vmem:[%s267 + $0x70] sm:$0xff] %v735
          %768 = vst [vmem:[%s267 + $0x78] sm:$0xff] %v736
          %769 = vst [vmem:[%s267 + $0x80] sm:$0xff] %v737
          %770 = vst [vmem:[%s267 + $0x88] sm:$0xff] %v738
          %771 = vst [vmem:[%s267 + $0x90] sm:$0xff] %v739
          %772 = vst [vmem:[%s267 + $0x98] sm:$0xff] %v740
          %773 = vst [vmem:[%s267 + $0xa0] sm:$0xff] %v741
          %774 = vst [vmem:[%s267 + $0xa8] sm:$0xff] %v742
          %775 = vst [vmem:[%s267 + $0xb0] sm:$0xff] %v743
          %776 = vst [vmem:[%s267 + $0xb8] sm:$0xff] %v744
          %777 = vst [vmem:[%s267 + $0xc0] sm:$0xff] %v745
          %778 = vst [vmem:[%s267 + $0xc8] sm:$0xff] %v746
          %779 = vst [vmem:[%s267 + $0xd0] sm:$0xff] %v747
          %780 = vst [vmem:[%s267 + $0xd8] sm:$0xff] %v748
          %781 = vst [vmem:[%s267 + $0xe0] sm:$0xff] %v749
          %782 = vst [vmem:[%s267 + $0xe8] sm:$0xff] %v750
          %783 = vst [vmem:[%s267 + $0xf0] sm:$0xff] %v751
          %784 = vst [vmem:[%s267 + $0xf8] sm:$0xff] %v752
        $region48: #{tpu_custom_call.1} parent=31 // pred_fallthru
          _
        %s785 = sand.u32 %s134, 1
        %s786 = scalar_lea.sflag [#allocation5], %s785
        %s787 = sand.u32 %s134, 1
        %s788 = smul.addr %s787, 256
        %s789 = scalar_lea.vmem [#allocation8], %s788
        // Predicated region
        $region49: #{tpu_custom_call.1} parent=31 // pred_check
          %p790 = pneg %p144
        $region50: #{tpu_custom_call.1} parent=31 // pred_check_branch
          %792 = sbr.rel (%p790) target = $region52
        $region51: #{tpu_custom_call.1} parent=31 // pred_region
          %s793 = smul.u32 32, %s28
          %s795 = ssub.s32 4096, 4096
          %796 = vsyncadd %s786, %s795
          %s797 = smul.addr %s793, 3
          %s798 = sadd.s32 %s29, %s797
          %s799 = smul.addr %s798, 128
          %s800 = scalar_lea.hbm %s3, %s799
          %s801 = sshll.u32 %s789, 4
          %s802 = int_to_ptr.vmem [resolvable:$true] %s801
          %807 = dma.vmem_to_hbm [thread:$0]  %s802, 4096, %s800, %s786, 128, 384, 8
        $region52: #{tpu_custom_call.1} parent=31 // pred_fallthru
          _
      $region32: #{tpu_custom_call.1} parent=5 // pred_fallthru
        _
      %p808 = scmp.le.s32.totalorder 2, %s18
      // Predicated region
      $region53: #{tpu_custom_call.1} parent=5 // pred_check
        %p809 = pneg %p808
      $region54: #{tpu_custom_call.1} parent=5 // pred_check_branch
        %811 = sbr.rel (%p809) target = $region56
      $region55: #{tpu_custom_call.1} parent=5 // pred_region
        %s812 = ssub.s32 %s18, 2
        // Predicated region
        $region57: #{tpu_custom_call.1} parent=55 // pred_check
          %p813 = pneg %p150
        $region58: #{tpu_custom_call.1} parent=55 // pred_check_branch
          %815 = sbr.rel (%p813) target = $region60
        $region59: #{tpu_custom_call.1} parent=55 // pred_region
          %s816 = sand.u32 %s135, 1
          %s817 = scalar_lea.sflag [#allocation5], %s816
          %s818 = sand.u32 %s135, 1
          %s819 = smul.addr %s818, 256
          %s820 = scalar_lea.vmem [#allocation8], %s819
          %821 = dma.done %s817, 4096
        $region60: #{tpu_custom_call.1} parent=55 // pred_fallthru
          _
      $region56: #{tpu_custom_call.1} parent=5 // pred_fallthru
        _
    $region6: #{tpu_custom_call.1} parent=1 // loop_footer
      %s22 = sadd.s32 1, %s18
    $region7: #{tpu_custom_call.1} parent=1 // loop_footer_branch
      %17 = sbr.rel target = $region3
    $region8: #{tpu_custom_call.1} parent=1 // loop_exit
      _
    %822 = vsyncpa [#allocation4], 1
    %s823 = scalar_lea.sflag [#allocation4], 1
    %824 = vsyncpa %s823, 1
    %825 = vsyncpa [#allocation7], 1
    %s826 = scalar_lea.sflag [#allocation7], 1
    %827 = vsyncpa %s826, 1
    %828 = vsyncpa [#allocation5], 1
    %s829 = scalar_lea.sflag [#allocation5], 1
    %830 = vsyncpa %s829, 1

</llo_original>
